<compile_context>
chip_gen: v6e
topology: v6e:2x2x1
jax: 0.10.0
libtpu: 0.0.40
codegen_flags: <defaults>
</compile_context>

<pallas_src>
import functools

import jax
import jax.numpy as jnp
from jax import lax
from jax.experimental import pallas as pl
from jax.experimental.pallas import tpu as pltpu


def _round_up(n, m):
    return ((n + m - 1) // m) * m


def _vmem_capacity_bytes():
    """Per-core VMEM capacity; conservative (v7x, 64 MiB) fallback."""
    try:
        info = pltpu.get_tpu_info()
        for name in ("vmem_capacity_bytes", "vmem_size_bytes", "vmem_bytes"):
            cap = getattr(info, name, None)
            if cap:
                return int(cap)
    except Exception:
        pass
    return 64 << 20


def _choose_batch_tile(B, bytes_per_batch, budget_bytes, mult=8, min_steps=4):
    """Largest batch tile (multiple of `mult`) fitting the per-buffer budget
    that still leaves >= min_steps grid steps (megacore + pipelining)."""
    if B <= mult:
        return B                       # single block; block dim == array dim
    by_budget = (budget_bytes // max(bytes_per_batch, 1)) // mult * mult
    if B >= mult * min_steps:
        by_steps = (B // min_steps) // mult * mult
    else:
        by_steps = mult
    tb = max(mult, min(by_budget, by_steps))
    return min(tb, _round_up(B, mult))


def _choose_chunk(Lp, tb, c_pad, itemsize, target_bytes=512 << 10, max_chunk=1024):
    """Largest multiple of 128 dividing Lp whose per-chunk working set
    (tb x c_pad x chunk) stays near the vreg-file scale."""
    cap = max(128, (target_bytes // max(tb * c_pad * itemsize, 1)) // 128 * 128)
    cap = min(cap, max_chunk, Lp)
    best = 128
    c = 256
    while c <= cap:
        if Lp % c == 0:
            best = c
        c += 128
    return best


def channel_gate_kernel(x_ref, w1t_ref, b1_ref, w2t_ref, b2_ref, o_ref,
                        pooled_ref, *, L, Lp, chunk):
    # x_ref:      (TB, C, Lp) native dtype; columns >= L are garbage (masked).
    # w1t_ref:    (C, H) f32   (Linear(C->H) weight, transposed, 1/L folded in)
    # b1_ref:     (1, H) f32
    # w2t_ref:    (H, C) f32
    # b2_ref:     (1, C) f32
    # o_ref:      (TB, Lp) native dtype
    # pooled_ref: (TB, C) f32 scratch
    n_chunks = Lp // chunk
    need_mask = L != Lp

    # ---- pass 1: masked sum over L (chunked over lanes, f32 accumulation) ----
    pooled_ref[...] = jnp.zeros_like(pooled_ref)

    @pl.loop(0, n_chunks)
    def _(ci):
        off = pl.multiple_of(ci * chunk, 128)
        xc = x_ref[:, :, pl.ds(off, chunk)]                        # (TB, C, chunk)
        if need_mask:
            col = lax.broadcasted_iota(jnp.int32, (1, 1, chunk), 2) + off
            xc = jnp.where(col < L, xc, jnp.zeros_like(xc))
        pooled_ref[...] += jnp.sum(xc, axis=2, dtype=jnp.float32)  # (TB, C)

    # ---- tiny MLP, run once per block (1/L already folded into w1t) ----
    pooled = pooled_ref[...]                                       # (TB, C) f32
    h = jnp.dot(pooled, w1t_ref[...],
                preferred_element_type=jnp.float32) + b1_ref[...]  # (TB, H)
    h = jnp.maximum(h, 0.0)
    att = jnp.dot(h, w2t_ref[...],
                  preferred_element_type=jnp.float32) + b2_ref[...]  # (TB, C)
    scale = jnp.tanh(att).astype(x_ref.dtype)                      # (TB, C)

    # ---- pass 2: gated channel-sum per chunk (VPU mul + sublane reduce) ----
    @pl.loop(0, n_chunks)
    def _(ci):
        off = pl.multiple_of(ci * chunk, 128)
        xc = x_ref[:, :, pl.ds(off, chunk)]                        # (TB, C, chunk)
        g = jnp.sum(xc * scale[:, :, None], axis=1,
                    dtype=jnp.float32)                             # (TB, chunk)
        o_ref[:, pl.ds(off, chunk)] = g.astype(o_ref.dtype)


def channel_gate(x, w1, b1, w2, b2):
    """x: (B, C, L); w1: (H, C); b1: (H,); w2: (C, H); b2: (C,). Returns (B, L)."""
    # TODO(synk): only the module-default pool_types='avg' branch is implemented
    # (pool_types='max' would swap the masked sum for a masked running max).
    B, C, L = x.shape
    H = w1.shape[0]
    out_dtype = x.dtype
    itemsize = jnp.dtype(x.dtype).itemsize
    sub = max(8, 32 // itemsize)             # sublane multiple for this dtype
    c_pad = _round_up(C, sub)

    # Lane-dense tiles: L padded to a multiple of 128 *inside the BlockSpec
    # only* (x is NOT padded in HBM; the kernel masks the extra columns).
    Lp = _round_up(max(L, 128), 128)

    # Generation-aware VMEM budget (v5e/v6e: 128 MiB, v7x: 64 MiB).
    vmem_cap = _vmem_capacity_bytes()
    usable = int(0.75 * vmem_cap)
    x_budget = max(4 << 20, (usable - (6 << 20)) // 3)   # per x buffer (x2 buffered)

    bytes_per_batch = c_pad * Lp * itemsize
    tb = _choose_batch_tile(B, bytes_per_batch, x_budget, mult=sub)
    n_blocks = pl.cdiv(B, tb)
    Bp = n_blocks * tb                      # output padded to exact blocks
    chunk = _choose_chunk(Lp, tb, c_pad, itemsize)

    # Parameters: pre-transposed, f32, with 1/L folded into W1 (free mean).
    w1t = jnp.transpose(w1).astype(jnp.float32) * (1.0 / float(L))   # (C, H)
    w2t = jnp.transpose(w2).astype(jnp.float32)                      # (H, C)
    b1r = b1.reshape(1, H).astype(jnp.float32)
    b2r = b2.reshape(1, C).astype(jnp.float32)

    # VMEM accounting (includes the C -> c_pad sublane padding of the x tile).
    x_block = tb * c_pad * Lp * itemsize
    out_block = _round_up(tb, sub) * Lp * itemsize
    param_bytes = (
        _round_up(C, 8) * _round_up(H, 128) + _round_up(H, 8) * _round_up(C, 128)
        + 8 * _round_up(H, 128) + 8 * _round_up(C, 128)) * 4
    scratch_bytes = _round_up(tb, 8) * 128 * 4
    vmem_need = 2 * x_block + 2 * out_block + param_bytes + scratch_bytes + (4 << 20)
    # TODO(synk): extremely large C*L per batch row could still exceed VMEM at
    # the minimum batch tile; that would need an extra L-tiled grid axis.
    vmem_limit = int(min(max(vmem_need, 16 << 20), usable))

    cost = pl.CostEstimate(
        flops=3 * B * C * L + 4 * B * C * H,
        transcendentals=B * C,
        bytes_accessed=B * C * L * itemsize + Bp * Lp * itemsize + param_bytes,
    )

    kernel = functools.partial(channel_gate_kernel, L=L, Lp=Lp, chunk=chunk)

    out = pl.pallas_call(
        kernel,
        out_shape=jax.ShapeDtypeStruct((Bp, Lp), out_dtype),
        grid=(n_blocks,),
        in_specs=[
            pl.BlockSpec((tb, C, Lp), lambda b: (b, 0, 0)),   # x: streamed blocks
            pl.BlockSpec((C, H), lambda b: (0, 0)),           # w1t: resident
            pl.BlockSpec((1, H), lambda b: (0, 0)),           # b1
            pl.BlockSpec((H, C), lambda b: (0, 0)),           # w2t
            pl.BlockSpec((1, C), lambda b: (0, 0)),           # b2
        ],
        out_specs=pl.BlockSpec((tb, Lp), lambda b: (b, 0)),
        scratch_shapes=[pltpu.VMEM((tb, C), jnp.float32)],
        compiler_params=pltpu.CompilerParams(
            dimension_semantics=("parallel",),
            vmem_limit_bytes=vmem_limit,
        ),
        cost_estimate=cost,
    )(x, w1t, b1r, w2t, b2r)

    return out[:B, :L]


def channel_gate_ref(x, w1, b1, w2, b2):
    """Pure-JAX reference mirroring the PyTorch forward (f32)."""
    x = x.astype(jnp.float32)
    avg = jnp.mean(x, axis=2)                         # (B, C)
    h = jnp.maximum(avg @ w1.T + b1, 0.0)             # (B, H)
    att = h @ w2.T + b2                               # (B, C)
    scale = jnp.tanh(att)[:, :, None]                 # (B, C, 1)
    return jnp.sum(x * scale, axis=1)                 # (B, L)


if __name__ == "__main__":
    # Module hyperparameters: gate_channels=12, reduction_ratio=3 -> hidden=4.
    C = 12
    H = C // 3

    key = jax.random.PRNGKey(0)
    kx, k1, kb1, k2, kb2, kx2, kx3 = jax.random.split(key, 7)

    # nn.Linear shapes: weight (out, in).
    w1 = jax.random.normal(k1, (H, C), dtype=jnp.float32) * 0.3
    b1 = jax.random.normal(kb1, (H,), dtype=jnp.float32) * 0.1
    w2 = jax.random.normal(k2, (C, H), dtype=jnp.float32) * 0.3
    b2 = jax.random.normal(kb2, (C,), dtype=jnp.float32) * 0.1

    # --- tiny f32 case (single block, masked L tail) ---
    B, L = 2, 16
    x = jax.random.normal(kx, (B, C, L), dtype=jnp.float32)
    out = jax.block_until_ready(channel_gate(x, w1, b1, w2, b2))
    ref = channel_gate_ref(x, w1, b1, w2, b2)
    assert out.shape == (B, L), out.shape
    assert jnp.allclose(out, ref, atol=1e-4, rtol=1e-4), (
        float(jnp.max(jnp.abs(out - ref))))

    # --- multi-block f32 case (aligned L, batch grid) ---
    B2, L2 = 16, 4096
    x2 = jax.random.normal(kx2, (B2, C, L2), dtype=jnp.float32)
    out2 = jax.block_until_ready(channel_gate(x2, w1, b1, w2, b2))
    ref2 = channel_gate_ref(x2, w1, b1, w2, b2)
    assert out2.shape == (B2, L2), out2.shape
    assert jnp.allclose(out2, ref2, atol=2e-4, rtol=1e-4), (
        float(jnp.max(jnp.abs(out2 - ref2))))

    # --- ragged case: B not a multiple of the tile, L not a multiple of 128 ---
    B3, L3 = 10, 1000
    x3 = jax.random.normal(kx3, (B3, C, L3), dtype=jnp.float32)
    out3 = jax.block_until_ready(channel_gate(x3, w1, b1, w2, b2))
    ref3 = channel_gate_ref(x3, w1, b1, w2, b2)
    assert out3.shape == (B3, L3), out3.shape
    assert jnp.allclose(out3, ref3, atol=2e-4, rtol=1e-4), (
        float(jnp.max(jnp.abs(out3 - ref3))))

    # --- bf16 streaming path (native-dtype stream, f32 accumulation) ---
    x_bf = x2.astype(jnp.bfloat16)
    out_bf = jax.block_until_ready(channel_gate(x_bf, w1, b1, w2, b2))
    ref_bf = channel_gate_ref(x_bf.astype(jnp.float32), w1, b1, w2, b2)
    assert out_bf.shape == (B2, L2), out_bf.shape
    assert jnp.allclose(out_bf.astype(jnp.float32), ref_bf, atol=1e-1, rtol=5e-2), (
        float(jnp.max(jnp.abs(out_bf.astype(jnp.float32) - ref_bf))))

    print("KERNEL_OK")
</pallas_src>

<mosaic_0001>
module attributes {stable_mosaic.version = 11 : i64} {
  func.func @channel_gate_kernel(%arg0: i32, %arg1: memref<2x12x128xf32, #tpu.memory_space<vmem>>, %arg2: memref<12x4xf32, #tpu.memory_space<vmem>>, %arg3: memref<1x4xf32, #tpu.memory_space<vmem>>, %arg4: memref<4x12xf32, #tpu.memory_space<vmem>>, %arg5: memref<1x12xf32, #tpu.memory_space<vmem>>, %arg6: memref<2x128xf32, #tpu.memory_space<vmem>>, %arg7: memref<2x12xf32, #tpu.memory_space<vmem>>) attributes {dimension_semantics = [#tpu.dimension_semantics<parallel>], iteration_bounds = array<i64: 1>, scalar_prefetch = 0 : i64, scratch_operands = 1 : i64, tpu.core_type = #tpu.core_type<tc>, window_params = [{transform_indices = @transform_0, window_bounds = array<i64: 2, 12, 128>}, {pipeline_mode = #tpu.pipeline_mode<synchronous>, transform_indices = @transform_1, window_bounds = array<i64: 12, 4>}, {pipeline_mode = #tpu.pipeline_mode<synchronous>, transform_indices = @transform_2, window_bounds = array<i64: 1, 4>}, {pipeline_mode = #tpu.pipeline_mode<synchronous>, transform_indices = @transform_3, window_bounds = array<i64: 4, 12>}, {pipeline_mode = #tpu.pipeline_mode<synchronous>, transform_indices = @transform_4, window_bounds = array<i64: 1, 12>}, {transform_indices = @transform_5, window_bounds = array<i64: 2, 128>}]} {
    %cst = arith.constant 0.000000e+00 : f32
    %0 = vector.broadcast %cst : f32 to vector<2x12xf32>
    %c0 = arith.constant 0 : index
    %c0_0 = arith.constant 0 : index
    %1 = vector.load %arg7[%c0, %c0_0] : memref<2x12xf32, #tpu.memory_space<vmem>>, vector<2x12xf32>
    tpu.vector_store %arg7[%c0, %c0_0], %0 {strides = array<i32>} : memref<2x12xf32, #tpu.memory_space<vmem>>, vector<2x12xf32>,
    %c0_i32 = arith.constant 0 : i32
    %c1_i32 = arith.constant 1 : i32
    %2 = arith.muli %c0_i32, %c1_i32 : i32
    %c0_i32_1 = arith.constant 0 : i32
    %3 = arith.addi %c0_i32_1, %2 : i32
    %c128_i32 = arith.constant 128 : i32
    %4 = arith.muli %3, %c128_i32 : i32
    %5 = tpu.assume_multiple %4, 128 : i32
    %c0_2 = arith.constant 0 : index
    %c0_3 = arith.constant 0 : index
    %6 = arith.index_cast %5 : i32 to index
    %7 = vector.load %arg1[%c0_2, %c0_3, %6] : memref<2x12x128xf32, #tpu.memory_space<vmem>>, vector<2x12x128xf32>
    %8 = tpu.iota {dimensions = array<i32: 2>} : vector<1x1x128xi32>
    %9 = vector.broadcast %5 : i32 to vector<1x1x128xi32>
    %10 = arith.addi %8, %9 : vector<1x1x128xi32>
    %c16_i32 = arith.constant 16 : i32
    %11 = vector.broadcast %c16_i32 : i32 to vector<1x1x128xi32>
    %12 = arith.cmpi slt, %10, %11 : vector<1x1x128xi32>
    %cst_4 = arith.constant 0.000000e+00 : f32
    %13 = vector.broadcast %cst_4 : f32 to vector<2x12x128xf32>
    %14 = vector.shape_cast %12 : vector<1x1x128xi1> to vector<1x1x128xi1>
    %15 = vector.broadcast %14 : vector<1x1x128xi1> to vector<2x12x128xi1>
    %16 = arith.select %15, %7, %13 : vector<2x12x128xi1>, vector<2x12x128xf32>
    %c0_5 = arith.constant 0 : index
    %c0_6 = arith.constant 0 : index
    %17 = vector.load %arg7[%c0_5, %c0_6] : memref<2x12xf32, #tpu.memory_space<vmem>>, vector<2x12xf32>
    %cst_7 = arith.constant dense<0.000000e+00> : vector<2x12xf32>
    %18 = vector.multi_reduction <add>, %16, %cst_7 [2] : vector<2x12x128xf32> to vector<2x12xf32>
    %19 = arith.addf %17, %18 : vector<2x12xf32>
    %c0_8 = arith.constant 0 : index
    %c0_9 = arith.constant 0 : index
    %20 = vector.load %arg7[%c0_8, %c0_9] : memref<2x12xf32, #tpu.memory_space<vmem>>, vector<2x12xf32>
    tpu.vector_store %arg7[%c0_8, %c0_9], %19 {strides = array<i32>} : memref<2x12xf32, #tpu.memory_space<vmem>>, vector<2x12xf32>,
    %c1_i32_10 = arith.constant 1 : i32
    %c0_11 = arith.constant 0 : index
    %c0_12 = arith.constant 0 : index
    %21 = vector.load %arg7[%c0_11, %c0_12] : memref<2x12xf32, #tpu.memory_space<vmem>>, vector<2x12xf32>
    %c0_13 = arith.constant 0 : index
    %c0_14 = arith.constant 0 : index
    %22 = vector.load %arg2[%c0_13, %c0_14] : memref<12x4xf32, #tpu.memory_space<vmem>>, vector<12x4xf32>
    %cst_15 = arith.constant dense<0.000000e+00> : vector<2x4xf32>
    %23 = tpu.matmul %21, %22, %cst_15 {dimension_numbers = #tpu.dot_dimension_numbers<[1], [0], [0], [1], [0, 0, 1, 1], [], []>} : vector<2x12xf32>, vector<12x4xf32>, vector<2x4xf32> -> vector<2x4xf32>
    %c0_16 = arith.constant 0 : index
    %c0_17 = arith.constant 0 : index
    %24 = vector.load %arg3[%c0_16, %c0_17] : memref<1x4xf32, #tpu.memory_space<vmem>>, vector<1x4xf32>
    %25 = vector.broadcast %24 : vector<1x4xf32> to vector<2x4xf32>
    %26 = arith.addf %23, %25 : vector<2x4xf32>
    %cst_18 = arith.constant 0.000000e+00 : f32
    %27 = vector.broadcast %cst_18 : f32 to vector<2x4xf32>
    %28 = arith.maximumf %26, %27 : vector<2x4xf32>
    %c0_19 = arith.constant 0 : index
    %c0_20 = arith.constant 0 : index
    %29 = vector.load %arg4[%c0_19, %c0_20] : memref<4x12xf32, #tpu.memory_space<vmem>>, vector<4x12xf32>
    %cst_21 = arith.constant dense<0.000000e+00> : vector<2x12xf32>
    %30 = tpu.matmul %28, %29, %cst_21 {dimension_numbers = #tpu.dot_dimension_numbers<[1], [0], [0], [1], [0, 0, 1, 1], [], []>} : vector<2x4xf32>, vector<4x12xf32>, vector<2x12xf32> -> vector<2x12xf32>
    %c0_22 = arith.constant 0 : index
    %c0_23 = arith.constant 0 : index
    %31 = vector.load %arg5[%c0_22, %c0_23] : memref<1x12xf32, #tpu.memory_space<vmem>>, vector<1x12xf32>
    %32 = vector.broadcast %31 : vector<1x12xf32> to vector<2x12xf32>
    %33 = arith.addf %30, %32 : vector<2x12xf32>
    %34 = math.tanh %33 : vector<2x12xf32>
    %c0_i32_24 = arith.constant 0 : i32
    %c1_i32_25 = arith.constant 1 : i32
    %35 = arith.muli %c0_i32_24, %c1_i32_25 : i32
    %c0_i32_26 = arith.constant 0 : i32
    %36 = arith.addi %c0_i32_26, %35 : i32
    %c128_i32_27 = arith.constant 128 : i32
    %37 = arith.muli %36, %c128_i32_27 : i32
    %38 = tpu.assume_multiple %37, 128 : i32
    %c0_28 = arith.constant 0 : index
    %c0_29 = arith.constant 0 : index
    %39 = arith.index_cast %38 : i32 to index
    %40 = vector.load %arg1[%c0_28, %c0_29, %39] : memref<2x12x128xf32, #tpu.memory_space<vmem>>, vector<2x12x128xf32>
    %41 = vector.shape_cast %34 : vector<2x12xf32> to vector<2x12x1xf32>
    %42 = vector.broadcast %41 : vector<2x12x1xf32> to vector<2x12x128xf32>
    %43 = arith.mulf %40, %42 : vector<2x12x128xf32>
    %cst_30 = arith.constant dense<0.000000e+00> : vector<2x128xf32>
    %44 = vector.multi_reduction <add>, %43, %cst_30 [1] : vector<2x12x128xf32> to vector<2x128xf32>
    %c0_31 = arith.constant 0 : index
    %45 = arith.index_cast %38 : i32 to index
    %46 = vector.load %arg6[%c0_31, %45] : memref<2x128xf32, #tpu.memory_space<vmem>>, vector<2x128xf32>
    tpu.vector_store %arg6[%c0_31, %45], %44 {strides = array<i32>} : memref<2x128xf32, #tpu.memory_space<vmem>>, vector<2x128xf32>,
    %c1_i32_32 = arith.constant 1 : i32
    return
  }
  func.func @transform_0(%arg0: i32) -> (i32, i32, i32) {
    %c0_i32 = arith.constant 0 : i32
    %c0_i32_0 = arith.constant 0 : i32
    %c0_i32_1 = arith.constant 0 : i32
    return %arg0, %c0_i32, %c0_i32_0 : i32, i32, i32
  }
  func.func @transform_1(%arg0: i32) -> (i32, i32) {
    %c0_i32 = arith.constant 0 : i32
    %c0_i32_0 = arith.constant 0 : i32
    %c0_i32_1 = arith.constant 0 : i32
    return %c0_i32, %c0_i32_0 : i32, i32
  }
  func.func @transform_2(%arg0: i32) -> (i32, i32) {
    %c0_i32 = arith.constant 0 : i32
    %c0_i32_0 = arith.constant 0 : i32
    %c0_i32_1 = arith.constant 0 : i32
    return %c0_i32, %c0_i32_0 : i32, i32
  }
  func.func @transform_3(%arg0: i32) -> (i32, i32) {
    %c0_i32 = arith.constant 0 : i32
    %c0_i32_0 = arith.constant 0 : i32
    %c0_i32_1 = arith.constant 0 : i32
    return %c0_i32, %c0_i32_0 : i32, i32
  }
  func.func @transform_4(%arg0: i32) -> (i32, i32) {
    %c0_i32 = arith.constant 0 : i32
    %c0_i32_0 = arith.constant 0 : i32
    %c0_i32_1 = arith.constant 0 : i32
    return %c0_i32, %c0_i32_0 : i32, i32
  }
  func.func @transform_5(%arg0: i32) -> (i32, i32) {
    %c0_i32 = arith.constant 0 : i32
    %c0_i32_0 = arith.constant 0 : i32
    return %arg0, %c0_i32 : i32, i32
  }
}

</mosaic_0001>

<llo_original>
// kernel: tpu_custom_call.1
$region0: #{tpu_custom_call.1}
  #allocation0 [shape = 'u32[]', space=smem, size = 0x4, offset = 0x4, fixed_abs, tag = 'smem constant byte address 0x4 - core index']
  #allocation1 [shape = 'u32[144,128]{1,0:T(1,128)}', space=vmem, size = 0x12000, scoped, tag = 'internal scratch']
  #allocation2 [shape = 'f32[2,12]{1,0:T(2,128)}', space=vmem, size = 0x400, scoped, tag = 'scratch operand']
  %s0 = inlined_call_operand.vmem [shape: f32[2,12,16], index: 0, kind: input, shape index: {}]
  %s1 = inlined_call_operand.vmem [shape: f32[12,4], index: 1, kind: input, shape index: {}]
  %s2 = inlined_call_operand.vmem [shape: f32[1,4], index: 2, kind: input, shape index: {}]
  %s3 = inlined_call_operand.vmem [shape: f32[4,12], index: 3, kind: input, shape index: {}]
  %s4 = inlined_call_operand.vmem [shape: f32[1,12], index: 4, kind: input, shape index: {}]
  %s5 = inlined_call_operand.hbm [shape: f32[2,128], index: 5, kind: output, shape index: {}]
  %s6 = sld [smem:[#allocation0]]
  $region30: #{tpu_custom_call.1} parent=0
    _
  %s8 = ssub.s32 1, %s6
  %s9 = scalar_select 0, %s8, %s6
  $region1: #{tpu_custom_call.1} parent=0
    #allocation3 [shape = 'u8[1024]{0}', space=vmem, size = 0x400, scoped, tag = 'output window, operand 0, single buffered']
    #allocation4 [shape = 's32[1]{0}', space=sflag, size = 0x4, scoped, tag = 'scoped memory for tpu_custom_call.1']
    %10 = vsyncpa [#allocation4], 0
    // Predicated region
    $region2: #{tpu_custom_call.1} parent=1 // pred_check
      _
    $region3: #{tpu_custom_call.1} parent=1 // pred_check_branch
      %12 = sbr.rel (0) target = $region5
    $region4: #{tpu_custom_call.1} parent=1 // pred_region
      _
    $region5: #{tpu_custom_call.1} parent=1 // pred_fallthru
      _
    // Predicated region
    $region6: #{tpu_custom_call.1} parent=1 // pred_check
      _
    $region7: #{tpu_custom_call.1} parent=1 // pred_check_branch
      %14 = sbr.rel (0) target = $region9
    $region8: #{tpu_custom_call.1} parent=1 // pred_region
      _
    $region9: #{tpu_custom_call.1} parent=1 // pred_fallthru
      _
    // Predicated region
    $region10: #{tpu_custom_call.1} parent=1 // pred_check
      _
    $region11: #{tpu_custom_call.1} parent=1 // pred_check_branch
      %16 = sbr.rel (0) target = $region13
    $region12: #{tpu_custom_call.1} parent=1 // pred_region
      _
    $region13: #{tpu_custom_call.1} parent=1 // pred_fallthru
      _
    // Predicated region
    $region14: #{tpu_custom_call.1} parent=1 // pred_check
      _
    $region15: #{tpu_custom_call.1} parent=1 // pred_check_branch
      %18 = sbr.rel (0) target = $region17
    $region16: #{tpu_custom_call.1} parent=1 // pred_region
      _
    $region17: #{tpu_custom_call.1} parent=1 // pred_fallthru
      _
    // Predicated region
    $region18: #{tpu_custom_call.1} parent=1 // pred_check
      _
    $region19: #{tpu_custom_call.1} parent=1 // pred_check_branch
      %20 = sbr.rel (0) target = $region21
    $region20: #{tpu_custom_call.1} parent=1 // pred_region
      _
    $region21: #{tpu_custom_call.1} parent=1 // pred_fallthru
      _
    %vm21 = vcmask 91136
    %22 = vst.msk [vmem:[#allocation2] sm:$0x3] %vm21, 0.0
    %v23 = vld [vmem:[%s0] sm:$0xff]
    %v24 = vld [vmem:[%s0 + $0x8] sm:$0xf]
    %v25 = vld [vmem:[%s0 + $0x10] sm:$0xff]
    %v26 = vld [vmem:[%s0 + $0x18] sm:$0xf]
    %v27 = vlaneseq
    %v28 = vand.u32 %v27, 127
    %v29 = vstv 0
    %v30 = vadd.s32 %v28, %v29
    %vm31 = vcmp.lt.s32.totalorder %v30, 16
    %v32 = vsel %vm31, 1, 0
    %vm33 = vcmp.eq.s32.totalorder %v32, 1
    %v34 = vsel %vm33, %v23, 0.0
    %v35 = vsel %vm33, %v24, 0.0
    %v36 = vsel %vm33, %v25, 0.0
    %v37 = vsel %vm33, %v26, 0.0
    %v38 = vld [vmem:[#allocation2] sm:$0x3]
    %39 = vadd.xlane.f32.xlu0 %v34
    %v40 = vpop.xlane.xlu0 %39
    %vm41 = vcmask 1043456
    %v42 = vsel %vm41, %v35, 0.0
    %43 = vadd.xlane.f32.xlu0 %v42
    %v44 = vpop.xlane.xlu0 %43
    %45 = vadd.xlane.f32.xlu0 %v36
    %v46 = vpop.xlane.xlu0 %45
    %v47 = vsel %vm41, %v37, 0.0
    %48 = vadd.xlane.f32.xlu0 %v47
    %v49 = vpop.xlane.xlu0 %48
    %v54 = vlaneseq
    %v55 = vshrl.u32 %v54, 7
    %v56 = vsub.s32 %v28, %v55
    %v57 = vrot.slane %v40, %v56
    %v58 = vadd.s32 %v28, 4294967288
    %v59 = vlaneseq
    %v60 = vshrl.u32 %v59, 7
    %v61 = vsub.s32 %v58, %v60
    %v62 = vrot.slane %v44, %v61
    %vm63 = vcmask 130112
    %v64 = vsel %vm63, %v62, %v57
    %v65 = vlaneseq
    %v66 = vshrl.u32 %v65, 7
    %v67 = vsub.s32 %v28, %v66
    %v68 = vrot.slane %v46, %v67
    %v69 = vlaneseq
    %v70 = vshrl.u32 %v69, 7
    %v71 = vsub.s32 %v58, %v70
    %v72 = vrot.slane %v49, %v71
    %v73 = vsel %vm63, %v72, %v68
    %vm74 = vcmask 1041409
    %v75 = vsel %vm74, %v73, %v64
    %v77 = vadd.f32 %v38, %v75
    %78 = vst.msk [vmem:[#allocation2] sm:$0x3] %vm21, %v77
    %v79 = vld [vmem:[#allocation2] sm:$0x3]
    %v80 = vld [vmem:[%s1] sm:$0xff]
    %v81 = vld [vmem:[%s1 + $0x8] sm:$0xf]
    %v82 = vld [vmem:[%s2] sm:$0x1]
    %v84 = vlaneseq
    %v85 = vshrl.u32 %v84, 7
    %v86 = vsub.s32 0, %v85
    %v87 = vrot.slane %v82, %v86
    %vm89 = vcmask 97280
    %v91 = vsel %vm89, %v79, 0
    %v94 = vsel %vm41, %v81, 0
    %96 = vmatprep.subr.mxu0 0.0
    %97 = vmatpush1.msra.mxu0 0.0
    %98 = vmatprep.subr.mxu0 0.0
    %99 = vmatpush1.msra.mxu0 0.0
    %100 = vmatprep.subr.mxu0 0.0
    %101 = vmatpush1.msra.mxu0 0.0
    %102 = vmatprep.subr.mxu0 0.0
    %103 = vmatpush1.msra.mxu0 0.0
    %104 = vmatprep.subr.mxu0 0.0
    %105 = vmatpush1.msra.mxu0 0.0
    %106 = vmatprep.subr.mxu0 0.0
    %107 = vmatpush1.msra.mxu0 0.0
    %108 = vmatprep.subr.mxu0 0.0
    %109 = vmatpush1.msra.mxu0 0.0
    %110 = vmatprep.subr.mxu0 0.0
    %111 = vmatpush1.msra.mxu0 0.0
    %112 = vmatprep.subr.mxu0 0.0
    %113 = vmatpush1.msra.mxu0 0.0
    %114 = vmatprep.subr.mxu0 0.0
    %115 = vmatpush1.msra.mxu0 0.0
    %116 = vmatprep.subr.mxu0 0.0
    %117 = vmatpush1.msra.mxu0 0.0
    %118 = vmatprep.subr.mxu0 0.0
    %119 = vmatpush1.msra.mxu0 0.0
    %120 = vmatprep.subr.mxu0 0.0
    %121 = vmatpush1.msra.mxu0 0.0
    %122 = vmatprep.subr.mxu0 0.0
    %123 = vmatpush1.msra.mxu0 0.0
    %124 = vmatprep.subr.mxu0 0.0
    %125 = vmatpush1.msra.mxu0 %v94
    %126 = vmatprep.subr.mxu0 0.0
    %127 = vmatpush1.msra.mxu0 %v80
    %128 = vmatprep.subr.mxu0 0.0
    %129 = vmatpush2.msra.mxu0 0.0
    %130 = vmatprep.subr.mxu0 0.0
    %131 = vmatpush2.msra.mxu0 0.0
    %132 = vmatprep.subr.mxu0 0.0
    %133 = vmatpush2.msra.mxu0 0.0
    %134 = vmatprep.subr.mxu0 0.0
    %135 = vmatpush2.msra.mxu0 0.0
    %136 = vmatprep.subr.mxu0 0.0
    %137 = vmatpush2.msra.mxu0 0.0
    %138 = vmatprep.subr.mxu0 0.0
    %139 = vmatpush2.msra.mxu0 0.0
    %140 = vmatprep.subr.mxu0 0.0
    %141 = vmatpush2.msra.mxu0 0.0
    %142 = vmatprep.subr.mxu0 0.0
    %143 = vmatpush2.msra.mxu0 0.0
    %144 = vmatprep.subr.mxu0 0.0
    %145 = vmatpush2.msra.mxu0 0.0
    %146 = vmatprep.subr.mxu0 0.0
    %147 = vmatpush2.msra.mxu0 0.0
    %148 = vmatprep.subr.mxu0 0.0
    %149 = vmatpush2.msra.mxu0 0.0
    %150 = vmatprep.subr.mxu0 0.0
    %151 = vmatpush2.msra.mxu0 0.0
    %152 = vmatprep.subr.mxu0 0.0
    %153 = vmatpush2.msra.mxu0 0.0
    %154 = vmatprep.subr.mxu0 0.0
    %155 = vmatpush2.msra.mxu0 0.0
    %156 = vmatprep.subr.mxu0 0.0
    %157 = vmatpush2.msra.mxu0 0.0
    %158 = vmatprep.subr.mxu0 0.0
    %159 = vmatpush2.msra.mxu0 0.0
    %160 = vmatprep.mubr.f32.mxu0 0.0
    %161 = vmatmul.mubr.f32.gmra.mxu0 %v91
    %v162 = vpop.f32.mrf.mxu0
    %v163 = vadd.f32 %v87, %v162
    %v164 = vpop.f32.mrf.mxu0
    %165 = vdwg.mxu0
    %v166 = vmax.f32 %v163, 0.0
    %v167 = vld [vmem:[%s3] sm:$0xf]
    %v168 = vld [vmem:[%s4] sm:$0x1]
    %v170 = vlaneseq
    %v171 = vshrl.u32 %v170, 7
    %v172 = vsub.s32 0, %v171
    %v173 = vrot.slane %v168, %v172
    %vm175 = vcmask 31744
    %v177 = vsel %vm175, %v166, 0
    %v180 = vsel %vm41, %v167, 0
    %182 = vmatprep.subr.mxu0 0.0
    %183 = vmatpush1.msra.mxu0 0.0
    %184 = vmatprep.subr.mxu0 0.0
    %185 = vmatpush1.msra.mxu0 0.0
    %186 = vmatprep.subr.mxu0 0.0
    %187 = vmatpush1.msra.mxu0 0.0
    %188 = vmatprep.subr.mxu0 0.0
    %189 = vmatpush1.msra.mxu0 0.0
    %190 = vmatprep.subr.mxu0 0.0
    %191 = vmatpush1.msra.mxu0 0.0
    %192 = vmatprep.subr.mxu0 0.0
    %193 = vmatpush1.msra.mxu0 0.0
    %194 = vmatprep.subr.mxu0 0.0
    %195 = vmatpush1.msra.mxu0 0.0
    %196 = vmatprep.subr.mxu0 0.0
    %197 = vmatpush1.msra.mxu0 0.0
    %198 = vmatprep.subr.mxu0 0.0
    %199 = vmatpush1.msra.mxu0 0.0
    %200 = vmatprep.subr.mxu0 0.0
    %201 = vmatpush1.msra.mxu0 0.0
    %202 = vmatprep.subr.mxu0 0.0
    %203 = vmatpush1.msra.mxu0 0.0
    %204 = vmatprep.subr.mxu0 0.0
    %205 = vmatpush1.msra.mxu0 0.0
    %206 = vmatprep.subr.mxu0 0.0
    %207 = vmatpush1.msra.mxu0 0.0
    %208 = vmatprep.subr.mxu0 0.0
    %209 = vmatpush1.msra.mxu0 0.0
    %210 = vmatprep.subr.mxu0 0.0
    %211 = vmatpush1.msra.mxu0 0.0
    %212 = vmatprep.subr.mxu0 0.0
    %213 = vmatpush1.msra.mxu0 %v180
    %214 = vmatprep.subr.mxu0 0.0
    %215 = vmatpush2.msra.mxu0 0.0
    %216 = vmatprep.subr.mxu0 0.0
    %217 = vmatpush2.msra.mxu0 0.0
    %218 = vmatprep.subr.mxu0 0.0
    %219 = vmatpush2.msra.mxu0 0.0
    %220 = vmatprep.subr.mxu0 0.0
    %221 = vmatpush2.msra.mxu0 0.0
    %222 = vmatprep.subr.mxu0 0.0
    %223 = vmatpush2.msra.mxu0 0.0
    %224 = vmatprep.subr.mxu0 0.0
    %225 = vmatpush2.msra.mxu0 0.0
    %226 = vmatprep.subr.mxu0 0.0
    %227 = vmatpush2.msra.mxu0 0.0
    %228 = vmatprep.subr.mxu0 0.0
    %229 = vmatpush2.msra.mxu0 0.0
    %230 = vmatprep.subr.mxu0 0.0
    %231 = vmatpush2.msra.mxu0 0.0
    %232 = vmatprep.subr.mxu0 0.0
    %233 = vmatpush2.msra.mxu0 0.0
    %234 = vmatprep.subr.mxu0 0.0
    %235 = vmatpush2.msra.mxu0 0.0
    %236 = vmatprep.subr.mxu0 0.0
    %237 = vmatpush2.msra.mxu0 0.0
    %238 = vmatprep.subr.mxu0 0.0
    %239 = vmatpush2.msra.mxu0 0.0
    %240 = vmatprep.subr.mxu0 0.0
    %241 = vmatpush2.msra.mxu0 0.0
    %242 = vmatprep.subr.mxu0 0.0
    %243 = vmatpush2.msra.mxu0 0.0
    %244 = vmatprep.subr.mxu0 0.0
    %245 = vmatpush2.msra.mxu0 0.0
    %246 = vmatprep.mubr.f32.mxu0 0.0
    %247 = vmatmul.mubr.f32.gmra.mxu0 %v177
    %v248 = vpop.f32.mrf.mxu0
    %v249 = vadd.f32 %v173, %v248
    %v250 = vpop.f32.mrf.mxu0
    %251 = vdwg.mxu0
    %v252 = vtanh.pop %v249
    %v253 = vld [vmem:[%s0] sm:$0xff]
    %v254 = vld [vmem:[%s0 + $0x8] sm:$0xf]
    %v255 = vld [vmem:[%s0 + $0x10] sm:$0xff]
    %v256 = vld [vmem:[%s0 + $0x18] sm:$0xf]
    %v257 = vlaneseq
    %v258 = vshrl.u32 %v257, 7
    %v259 = vsub.s32 0, %v258
    %v260 = vrot.slane %v252, %v259
    %262 = vbcast.lane.b32.xlu0 %v260, 256
    %v263 = vpop.permute.xlu0 %262
    %s265 = sor.u32 256, 8
    %266 = vbcast.lane.b32.xlu0 %v260, %s265
    %v267 = vpop.permute.xlu0 %266
    %v268 = vlaneseq
    %v269 = vshrl.u32 %v268, 7
    %v270 = vsub.s32 1, %v269
    %v271 = vrot.slane %v252, %v270
    %273 = vbcast.lane.b32.xlu0 %v271, 256
    %v274 = vpop.permute.xlu0 %273
    %s276 = sor.u32 256, 8
    %277 = vbcast.lane.b32.xlu0 %v271, %s276
    %v278 = vpop.permute.xlu0 %277
    %v279 = vmul.f32 %v253, %v263
    %v280 = vmul.f32 %v254, %v267
    %v281 = vmul.f32 %v255, %v274
    %v282 = vmul.f32 %v256, %v278
    %v283 = vsel %vm41, %v280, 0.0
    %v284 = vadd.f32 %v279, %v283
    %v285 = vrot.slane %v284, 4
    %v286 = vadd.f32 %v284, %v285
    %v287 = vrot.slane %v286, 2
    %v288 = vadd.f32 %v286, %v287
    %v289 = vrot.slane %v288, 1
    %v290 = vadd.f32 %v288, %v289
    %v291 = vsel %vm41, %v282, 0.0
    %v292 = vadd.f32 %v281, %v291
    %v293 = vrot.slane %v292, 4
    %v294 = vadd.f32 %v292, %v293
    %v295 = vrot.slane %v294, 2
    %v296 = vadd.f32 %v294, %v295
    %v297 = vrot.slane %v296, 1
    %v298 = vadd.f32 %v296, %v297
    %v301 = vsel %vm74, %v298, %v290
    %303 = vst [vmem:[#allocation3] sm:$0x3] %v301
    // Predicated region
    $region22: #{tpu_custom_call.1} parent=1 // pred_check
      _
    $region23: #{tpu_custom_call.1} parent=1 // pred_check_branch
      %305 = sbr.rel (0) target = $region25
    $region24: #{tpu_custom_call.1} parent=1 // pred_region
      %s307 = ssub.s32 32, 32
      %308 = vsyncadd [#allocation4], %s307
      %s310 = sshll.u32 [#allocation3], 4
      %s311 = int_to_ptr.vmem [resolvable:$true] %s310
      %313 = dma.vmem_to_hbm [thread:$0]  %s311, 32, %s5, [#allocation4]
    $region25: #{tpu_custom_call.1} parent=1 // pred_fallthru
      _
    // Predicated region
    $region26: #{tpu_custom_call.1} parent=1 // pred_check
      _
    $region27: #{tpu_custom_call.1} parent=1 // pred_check_branch
      %315 = sbr.rel (0) target = $region29
    $region28: #{tpu_custom_call.1} parent=1 // pred_region
      %316 = dma.done [#allocation4], 32
    $region29: #{tpu_custom_call.1} parent=1 // pred_fallthru
      _
    %317 = vsyncpa [#allocation4], 1

</llo_original>
